<compile_context>
chip_gen: v6e
topology: v6e:2x2x1
jax: 0.10.0
libtpu: 0.0.40
codegen_flags: <defaults>
</compile_context>

<pallas_src>
import functools

import jax
import jax.numpy as jnp
from jax.experimental import pallas as pl
from jax.experimental.pallas import tpu as pltpu

LOG_2PI = float(jnp.log(2.0 * jnp.pi))
LANES = 128  # padded fused hidden width / output slab width


def _round_up(x, m):
    return (x + m - 1) // m * m


def _actor_critic_kernel(obs_ref, act_ref, wts_ref, vec_ref, out_ref,
                         *, dp, act_dim, hp):
    """One (TB, dp) obs tile -> one (TB, hp) output slab.

    wts_ref rows:  [0:dp]        W1  (dp, hp)   fused [vW1 | pW1 | 0]
                   [dp:dp+hp]    W2  (hp, hp)   blockdiag(vW2, pW2)
                   [dp+hp:dp+2hp]W3  (hp, hp)   cols 0..A-1 = pWm, col A = vWc
    vec_ref rows:  0: b1   1: b2   2: b3   3: inv_2var   4: -log_std-0.5*log(2pi)
    out slab cols: [0:A] mu, [A] val, [A+1] logp, rest 0.
    """
    obs = obs_ref[...]                                   # (TB, dp)
    w1 = wts_ref[:dp, :]                                 # (dp, hp)
    w2 = wts_ref[dp:dp + hp, :]                          # (hp, hp)
    w3 = wts_ref[dp + hp:dp + 2 * hp, :]                 # (hp, hp)
    b1 = vec_ref[0:1, :]                                 # (1, hp)
    b2 = vec_ref[1:2, :]
    b3 = vec_ref[2:3, :]
    inv2var = vec_ref[3:4, :act_dim]                     # (1, A)
    lc = vec_ref[4:5, :act_dim]                          # (1, A)

    # fused encoders: padded columns stay exactly 0 (tanh(0+0)=0, zero W rows).
    h1 = jnp.tanh(jnp.dot(obs, w1, preferred_element_type=jnp.float32) + b1)
    h2 = jnp.tanh(jnp.dot(h1, w2, preferred_element_type=jnp.float32) + b2)
    head = jnp.dot(h2, w3, preferred_element_type=jnp.float32) + b3  # (TB, hp)

    # Normal(mu, std).log_prob(act).sum(-1, keepdim=True)
    act = act_ref[...]                                   # (TB, A)
    mu = head[:, :act_dim]                               # (TB, A)
    diff = act - mu
    logp = jnp.sum(-(diff * diff) * inv2var + lc, axis=-1, keepdims=True)

    # place logp into column A+1 (zero in `head`) -> single full-width store.
    col = jax.lax.broadcasted_iota(jnp.int32, head.shape, 1)
    out_ref[...] = jnp.where(col == act_dim + 1, logp, head)


def _pack_params(params, dp, hp):
    """Fuse + pad the 13 parameter arrays into 2 lane-dense buffers."""
    f32 = jnp.float32
    vW1, pW1 = params["vW1"].astype(f32), params["pW1"].astype(f32)
    vW2, pW2 = params["vW2"].astype(f32), params["pW2"].astype(f32)
    vWc, pWm = params["vWc"].astype(f32), params["pWm"].astype(f32)
    d, h = vW1.shape
    a = pWm.shape[1]
    assert 2 * h <= hp and a + 2 <= hp

    w1 = jnp.zeros((dp, hp), f32).at[:d, :h].set(vW1).at[:d, h:2 * h].set(pW1)
    w2 = (jnp.zeros((hp, hp), f32)
          .at[:h, :h].set(vW2)
          .at[h:2 * h, h:2 * h].set(pW2))
    # head: cols 0..A-1 = mu (policy feats), col A = value (value feats)
    w3 = (jnp.zeros((hp, hp), f32)
          .at[h:2 * h, :a].set(pWm)
          .at[:h, a:a + 1].set(vWc))
    wts = jnp.concatenate([w1, w2, w3], axis=0)          # (dp + 2*hp, hp)

    log_std = params["logstd"].astype(f32)               # (1, A)
    inv2var = 0.5 * jnp.exp(-2.0 * log_std)
    lc = -log_std - 0.5 * LOG_2PI
    vec = jnp.zeros((8, hp), f32)
    vec = vec.at[0, :h].set(params["vb1"][0]).at[0, h:2 * h].set(params["pb1"][0])
    vec = vec.at[1, :h].set(params["vb2"][0]).at[1, h:2 * h].set(params["pb2"][0])
    vec = vec.at[2, :a].set(params["pbm"][0]).at[2, a].set(params["vbc"][0, 0])
    vec = vec.at[3, :a].set(inv2var[0])
    vec = vec.at[4, :a].set(lc[0])
    return wts, vec


def actor_critic_forward(obs, act, params, *, block_b=256):
    """Runs ActorCritic.forward(obs, act) inside one Pallas kernel.

    Returns (val, (mu, std), logp, entropy) — the Normal distribution is
    represented by its (mu, std) parameters.
    """
    B, D = obs.shape
    A = act.shape[1]
    dp = _round_up(D, 8)
    hp = LANES

    tb = block_b if B >= block_b else _round_up(B, 8)
    bp = _round_up(B, tb)

    obs_p = jnp.zeros((bp, dp), jnp.float32).at[:B, :D].set(obs.astype(jnp.float32))
    act_p = jnp.zeros((bp, A), jnp.float32).at[:B, :].set(act.astype(jnp.float32))
    wts, vec = _pack_params(params, dp, hp)

    kernel = functools.partial(_actor_critic_kernel, dp=dp, act_dim=A, hp=hp)

    slab = pl.pallas_call(
        kernel,
        out_shape=jax.ShapeDtypeStruct((bp, hp), jnp.float32),
        grid_spec=pltpu.PrefetchScalarGridSpec(
            num_scalar_prefetch=0,
            grid=(bp // tb,),
            in_specs=[
                pl.BlockSpec((tb, dp), lambda i: (i, 0)),       # obs tile
                pl.BlockSpec((tb, A), lambda i: (i, 0)),        # act tile
                pl.BlockSpec((dp + 2 * hp, hp), lambda i: (0, 0)),  # weights (resident)
                pl.BlockSpec((8, hp), lambda i: (0, 0)),        # biases / logstd consts
            ],
            out_specs=pl.BlockSpec((tb, hp), lambda i: (i, 0)),
        ),
        compiler_params=pltpu.CompilerParams(
            dimension_semantics=("parallel",)),
    )(obs_p, act_p, wts, vec)

    mu = slab[:B, :A]
    val = slab[:B, A:A + 1]
    logp = slab[:B, A + 1:A + 2]

    # batch-independent quantities computed in plain JAX (hoisted out of kernel)
    log_std = params["logstd"].astype(jnp.float32)
    std = jnp.exp(log_std)
    ent = jnp.mean(0.5 + 0.5 * LOG_2PI + log_std)
    return val, (mu, std), logp, ent


def init_params(key, obs_dim, hidden, act_dim):
    """Deterministic synthetic parameter init (shapes match the PyTorch module)."""
    ks = jax.random.split(key, 10)
    s = lambda shape, k: (0.1 * jax.random.normal(k, shape)).astype(jnp.float32)
    params = {
        # value-path encoder + critic head (Linear(obs_feat_dim, 1))
        "vW1": s((obs_dim, hidden), ks[0]), "vb1": s((1, hidden), ks[6]),
        "vW2": s((hidden, hidden), ks[1]),  "vb2": s((1, hidden), ks[7]),
        "vWc": s((hidden, 1), ks[2]),       "vbc": s((1, 1), ks[8]),
        # policy-path encoder + mu head (Linear(obs_feat_dim, act_dim))
        "pW1": s((obs_dim, hidden), ks[3]), "pb1": s((1, hidden), ks[9]),
        "pW2": s((hidden, hidden), ks[4]),  "pb2": jnp.zeros((1, hidden), jnp.float32),
        "pWm": s((hidden, act_dim), ks[5]), "pbm": jnp.zeros((1, act_dim), jnp.float32),
        # nn.Parameter(torch.zeros(1, act_dim))
        "logstd": jnp.zeros((1, act_dim), jnp.float32),
    }
    return params


def _reference_forward(obs, act, p):
    """Plain-JAX reference mirroring the PyTorch forward."""
    h = jnp.tanh(obs @ p["vW1"] + p["vb1"])
    h = jnp.tanh(h @ p["vW2"] + p["vb2"])
    val = h @ p["vWc"] + p["vbc"]
    g = jnp.tanh(obs @ p["pW1"] + p["pb1"])
    g = jnp.tanh(g @ p["pW2"] + p["pb2"])
    mu = g @ p["pWm"] + p["pbm"]
    std = jnp.exp(p["logstd"])
    log_prob = -((act - mu) ** 2) / (2.0 * std * std) - p["logstd"] - 0.5 * LOG_2PI
    logp = jnp.sum(log_prob, axis=-1, keepdims=True)
    ent = jnp.mean(jnp.broadcast_to(0.5 + 0.5 * LOG_2PI + p["logstd"], mu.shape))
    return val, (mu, std), logp, ent


if __name__ == "__main__":
    B, OBS_DIM, HIDDEN, ACT_DIM = 8, 16, 32, 4

    key = jax.random.PRNGKey(0)
    k_obs, k_act, k_par = jax.random.split(key, 3)
    obs = jax.random.normal(k_obs, (B, OBS_DIM), dtype=jnp.float32)
    act = jax.random.normal(k_act, (B, ACT_DIM), dtype=jnp.float32)
    params = init_params(k_par, OBS_DIM, HIDDEN, ACT_DIM)

    val, (mu, std), logp, ent = jax.block_until_ready(
        actor_critic_forward(obs, act, params))

    # sanity check against a plain-JAX reference
    r_val, (r_mu, r_std), r_logp, r_ent = _reference_forward(obs, act, params)
    assert jnp.allclose(val, r_val, atol=1e-5), (val, r_val)
    assert jnp.allclose(mu, r_mu, atol=1e-5)
    assert jnp.allclose(std, r_std, atol=1e-5)
    assert jnp.allclose(logp, r_logp, atol=1e-5)
    assert jnp.allclose(ent, r_ent, atol=1e-5)

    print("KERNEL_OK")
</pallas_src>

<mosaic_0001>
module attributes {stable_mosaic.version = 11 : i64} {
  func.func @_actor_critic_kernel(%arg0: i32, %arg1: memref<8x16xf32, #tpu.memory_space<vmem>>, %arg2: memref<8x4xf32, #tpu.memory_space<vmem>>, %arg3: memref<272x128xf32, #tpu.memory_space<vmem>>, %arg4: memref<8x128xf32, #tpu.memory_space<vmem>>, %arg5: memref<8x128xf32, #tpu.memory_space<vmem>>) attributes {dimension_semantics = [#tpu.dimension_semantics<parallel>], iteration_bounds = array<i64: 1>, scalar_prefetch = 0 : i64, scratch_operands = 0 : i64, tpu.core_type = #tpu.core_type<tc>, window_params = [{transform_indices = @transform_0, window_bounds = array<i64: 8, 16>}, {transform_indices = @transform_1, window_bounds = array<i64: 8, 4>}, {pipeline_mode = #tpu.pipeline_mode<synchronous>, transform_indices = @transform_2, window_bounds = array<i64: 272, 128>}, {pipeline_mode = #tpu.pipeline_mode<synchronous>, transform_indices = @transform_3, window_bounds = array<i64: 8, 128>}, {transform_indices = @transform_4, window_bounds = array<i64: 8, 128>}]} {
    %c0 = arith.constant 0 : index
    %c0_0 = arith.constant 0 : index
    %0 = vector.load %arg1[%c0, %c0_0] : memref<8x16xf32, #tpu.memory_space<vmem>>, vector<8x16xf32>
    %c0_1 = arith.constant 0 : index
    %c0_2 = arith.constant 0 : index
    %1 = vector.load %arg3[%c0_1, %c0_2] : memref<272x128xf32, #tpu.memory_space<vmem>>, vector<16x128xf32>
    %c16 = arith.constant 16 : index
    %c0_3 = arith.constant 0 : index
    %2 = vector.load %arg3[%c16, %c0_3] : memref<272x128xf32, #tpu.memory_space<vmem>>, vector<128x128xf32>
    %c144 = arith.constant 144 : index
    %c0_4 = arith.constant 0 : index
    %3 = vector.load %arg3[%c144, %c0_4] : memref<272x128xf32, #tpu.memory_space<vmem>>, vector<128x128xf32>
    %c0_5 = arith.constant 0 : index
    %c0_6 = arith.constant 0 : index
    %4 = vector.load %arg4[%c0_5, %c0_6] : memref<8x128xf32, #tpu.memory_space<vmem>>, vector<1x128xf32>
    %c1 = arith.constant 1 : index
    %c0_7 = arith.constant 0 : index
    %5 = vector.load %arg4[%c1, %c0_7] : memref<8x128xf32, #tpu.memory_space<vmem>>, vector<1x128xf32>
    %c2 = arith.constant 2 : index
    %c0_8 = arith.constant 0 : index
    %6 = vector.load %arg4[%c2, %c0_8] : memref<8x128xf32, #tpu.memory_space<vmem>>, vector<1x128xf32>
    %c3 = arith.constant 3 : index
    %c0_9 = arith.constant 0 : index
    %7 = vector.load %arg4[%c3, %c0_9] : memref<8x128xf32, #tpu.memory_space<vmem>>, vector<1x4xf32>
    %c4 = arith.constant 4 : index
    %c0_10 = arith.constant 0 : index
    %8 = vector.load %arg4[%c4, %c0_10] : memref<8x128xf32, #tpu.memory_space<vmem>>, vector<1x4xf32>
    %cst = arith.constant dense<0.000000e+00> : vector<8x128xf32>
    %9 = tpu.matmul %0, %1, %cst {dimension_numbers = #tpu.dot_dimension_numbers<[1], [0], [0], [1], [0, 0, 1, 1], [], []>} : vector<8x16xf32>, vector<16x128xf32>, vector<8x128xf32> -> vector<8x128xf32>
    %10 = vector.broadcast %4 : vector<1x128xf32> to vector<8x128xf32>
    %11 = arith.addf %9, %10 : vector<8x128xf32>
    %12 = math.tanh %11 : vector<8x128xf32>
    %cst_11 = arith.constant dense<0.000000e+00> : vector<8x128xf32>
    %13 = tpu.matmul %12, %2, %cst_11 {dimension_numbers = #tpu.dot_dimension_numbers<[1], [0], [0], [1], [0, 0, 1, 1], [], []>} : vector<8x128xf32>, vector<128x128xf32>, vector<8x128xf32> -> vector<8x128xf32>
    %14 = vector.broadcast %5 : vector<1x128xf32> to vector<8x128xf32>
    %15 = arith.addf %13, %14 : vector<8x128xf32>
    %16 = math.tanh %15 : vector<8x128xf32>
    %cst_12 = arith.constant dense<0.000000e+00> : vector<8x128xf32>
    %17 = tpu.matmul %16, %3, %cst_12 {dimension_numbers = #tpu.dot_dimension_numbers<[1], [0], [0], [1], [0, 0, 1, 1], [], []>} : vector<8x128xf32>, vector<128x128xf32>, vector<8x128xf32> -> vector<8x128xf32>
    %18 = vector.broadcast %6 : vector<1x128xf32> to vector<8x128xf32>
    %19 = arith.addf %17, %18 : vector<8x128xf32>
    %c0_13 = arith.constant 0 : index
    %c0_14 = arith.constant 0 : index
    %20 = vector.load %arg2[%c0_13, %c0_14] : memref<8x4xf32, #tpu.memory_space<vmem>>, vector<8x4xf32>
    %21 = vector.extract_strided_slice %19 {offsets = [0, 0], sizes = [8, 4], strides = [1, 1]} : vector<8x128xf32> to vector<8x4xf32>
    %22 = arith.subf %20, %21 : vector<8x4xf32>
    %23 = arith.mulf %22, %22 : vector<8x4xf32>
    %cst_15 = arith.constant 0.000000e+00 : f32
    %24 = vector.broadcast %cst_15 : f32 to vector<8x4xf32>
    %25 = arith.subf %24, %23 : vector<8x4xf32>
    %26 = vector.broadcast %7 : vector<1x4xf32> to vector<8x4xf32>
    %27 = arith.mulf %25, %26 : vector<8x4xf32>
    %28 = vector.broadcast %8 : vector<1x4xf32> to vector<8x4xf32>
    %29 = arith.addf %27, %28 : vector<8x4xf32>
    %cst_16 = arith.constant dense<0.000000e+00> : vector<8xf32>
    %30 = vector.multi_reduction <add>, %29, %cst_16 [1] : vector<8x4xf32> to vector<8xf32>
    %31 = vector.shape_cast %30 : vector<8xf32> to vector<8x1xf32>
    %32 = tpu.iota {dimensions = array<i32: 1>} : vector<8x128xi32>
    %c5_i32 = arith.constant 5 : i32
    %33 = vector.broadcast %c5_i32 : i32 to vector<8x128xi32>
    %34 = arith.cmpi eq, %32, %33 : vector<8x128xi32>
    %35 = vector.shape_cast %31 : vector<8x1xf32> to vector<8x1xf32>
    %36 = vector.broadcast %35 : vector<8x1xf32> to vector<8x128xf32>
    %37 = arith.select %34, %36, %19 : vector<8x128xi1>, vector<8x128xf32>
    %c0_17 = arith.constant 0 : index
    %c0_18 = arith.constant 0 : index
    %38 = vector.load %arg5[%c0_17, %c0_18] : memref<8x128xf32, #tpu.memory_space<vmem>>, vector<8x128xf32>
    tpu.vector_store %arg5[%c0_17, %c0_18], %37 {strides = array<i32>} : memref<8x128xf32, #tpu.memory_space<vmem>>, vector<8x128xf32>,
    return
  }
  func.func @transform_0(%arg0: i32) -> (i32, i32) {
    %c0_i32 = arith.constant 0 : i32
    %c0_i32_0 = arith.constant 0 : i32
    return %arg0, %c0_i32 : i32, i32
  }
  func.func @transform_1(%arg0: i32) -> (i32, i32) {
    %c0_i32 = arith.constant 0 : i32
    %c0_i32_0 = arith.constant 0 : i32
    return %arg0, %c0_i32 : i32, i32
  }
  func.func @transform_2(%arg0: i32) -> (i32, i32) {
    %c0_i32 = arith.constant 0 : i32
    %c0_i32_0 = arith.constant 0 : i32
    %c0_i32_1 = arith.constant 0 : i32
    return %c0_i32, %c0_i32_0 : i32, i32
  }
  func.func @transform_3(%arg0: i32) -> (i32, i32) {
    %c0_i32 = arith.constant 0 : i32
    %c0_i32_0 = arith.constant 0 : i32
    %c0_i32_1 = arith.constant 0 : i32
    return %c0_i32, %c0_i32_0 : i32, i32
  }
  func.func @transform_4(%arg0: i32) -> (i32, i32) {
    %c0_i32 = arith.constant 0 : i32
    %c0_i32_0 = arith.constant 0 : i32
    return %arg0, %c0_i32 : i32, i32
  }
}

</mosaic_0001>

<llo_original>
// kernel: tpu_custom_call.1
$region0: #{tpu_custom_call.1}
  #allocation0 [shape = 'u32[]', space=smem, size = 0x4, offset = 0x4, fixed_abs, tag = 'smem constant byte address 0x4 - core index']
  #allocation1 [shape = 'u32[144,128]{1,0:T(1,128)}', space=vmem, size = 0x12000, scoped, tag = 'internal scratch']
  %s0 = inlined_call_operand.vmem [shape: f32[8,16], index: 0, kind: input, shape index: {}]
  %s1 = inlined_call_operand.vmem [shape: f32[8,4], index: 1, kind: input, shape index: {}]
  %s2 = inlined_call_operand.hbm [shape: f32[272,128], index: 2, kind: input, shape index: {}]
  %s3 = inlined_call_operand.vmem [shape: f32[8,128], index: 3, kind: input, shape index: {}]
  %s4 = inlined_call_operand.hbm [shape: f32[8,128], index: 4, kind: output, shape index: {}]
  %s5 = sld [smem:[#allocation0]]
  $region30: #{tpu_custom_call.1} parent=0
    _
  %s7 = ssub.s32 1, %s5
  %s8 = scalar_select 0, %s7, %s5
  $region1: #{tpu_custom_call.1} parent=0
    #allocation2 [shape = 'u8[139264]{0}', space=vmem, size = 0x22000, scoped, tag = 'input window, operand 2, single buffered']
    #allocation3 [shape = 's32[1]{0}', space=sflag, size = 0x4, scoped, tag = 'scoped memory for tpu_custom_call.1']
    #allocation4 [shape = 's32[1]{0}', space=sflag, size = 0x4, scoped, tag = 'scoped memory for tpu_custom_call.1']
    #allocation5 [shape = 'u8[4096]{0}', space=vmem, size = 0x1000, scoped, tag = 'output window, operand 0, single buffered']
    %9 = vsyncpa [#allocation3], 0
    %10 = vsyncpa [#allocation4], 0
    // Predicated region
    $region2: #{tpu_custom_call.1} parent=1 // pred_check
      _
    $region3: #{tpu_custom_call.1} parent=1 // pred_check_branch
      %12 = sbr.rel (0) target = $region5
    $region4: #{tpu_custom_call.1} parent=1 // pred_region
      _
    $region5: #{tpu_custom_call.1} parent=1 // pred_fallthru
      _
    // Predicated region
    $region6: #{tpu_custom_call.1} parent=1 // pred_check
      _
    $region7: #{tpu_custom_call.1} parent=1 // pred_check_branch
      %14 = sbr.rel (0) target = $region9
    $region8: #{tpu_custom_call.1} parent=1 // pred_region
      _
    $region9: #{tpu_custom_call.1} parent=1 // pred_fallthru
      _
    // Predicated region
    $region10: #{tpu_custom_call.1} parent=1 // pred_check
      _
    $region11: #{tpu_custom_call.1} parent=1 // pred_check_branch
      %16 = sbr.rel (0) target = $region13
    $region12: #{tpu_custom_call.1} parent=1 // pred_region
      %s18 = ssub.s32 4352, 4352
      %19 = vsyncadd [#allocation3], %s18
      %s20 = sshll.u32 [#allocation2], 4
      %s21 = int_to_ptr.vmem [resolvable:$true] %s20
      %26 = dma.hbm_to_vmem [thread:$0]  %s2, 4352, %s21, [#allocation3], 128, 128, 8
    $region13: #{tpu_custom_call.1} parent=1 // pred_fallthru
      _
    // Predicated region
    $region14: #{tpu_custom_call.1} parent=1 // pred_check
      _
    $region15: #{tpu_custom_call.1} parent=1 // pred_check_branch
      %28 = sbr.rel (0) target = $region17
    $region16: #{tpu_custom_call.1} parent=1 // pred_region
      _
    $region17: #{tpu_custom_call.1} parent=1 // pred_fallthru
      _
    // Predicated region
    $region18: #{tpu_custom_call.1} parent=1 // pred_check
      _
    $region19: #{tpu_custom_call.1} parent=1 // pred_check_branch
      %30 = sbr.rel (0) target = $region21
    $region20: #{tpu_custom_call.1} parent=1 // pred_region
      %31 = dma.done [#allocation3], 4352
    $region21: #{tpu_custom_call.1} parent=1 // pred_fallthru
      _
    %v32 = vld [vmem:[%s0] sm:$0xff]
    %v33 = vld [vmem:[#allocation2] sm:$0xff]
    %v34 = vld [vmem:[#allocation2 + $0x8] sm:$0xff]
    %v35 = vld [vmem:[#allocation2 + $0x10] sm:$0xff]
    %v36 = vld [vmem:[#allocation2 + $0x18] sm:$0xff]
    %v37 = vld [vmem:[#allocation2 + $0x20] sm:$0xff]
    %v38 = vld [vmem:[#allocation2 + $0x28] sm:$0xff]
    %v39 = vld [vmem:[#allocation2 + $0x30] sm:$0xff]
    %v40 = vld [vmem:[#allocation2 + $0x38] sm:$0xff]
    %v41 = vld [vmem:[#allocation2 + $0x40] sm:$0xff]
    %v42 = vld [vmem:[#allocation2 + $0x48] sm:$0xff]
    %v43 = vld [vmem:[#allocation2 + $0x50] sm:$0xff]
    %v44 = vld [vmem:[#allocation2 + $0x58] sm:$0xff]
    %v45 = vld [vmem:[#allocation2 + $0x60] sm:$0xff]
    %v46 = vld [vmem:[#allocation2 + $0x68] sm:$0xff]
    %v47 = vld [vmem:[#allocation2 + $0x70] sm:$0xff]
    %v48 = vld [vmem:[#allocation2 + $0x78] sm:$0xff]
    %v49 = vld [vmem:[#allocation2 + $0x80] sm:$0xff]
    %v50 = vld [vmem:[#allocation2 + $0x88] sm:$0xff]
    %v51 = vld [vmem:[#allocation2 + $0x90] sm:$0xff]
    %v52 = vld [vmem:[#allocation2 + $0x98] sm:$0xff]
    %v53 = vld [vmem:[#allocation2 + $0xa0] sm:$0xff]
    %v54 = vld [vmem:[#allocation2 + $0xa8] sm:$0xff]
    %v55 = vld [vmem:[#allocation2 + $0xb0] sm:$0xff]
    %v56 = vld [vmem:[#allocation2 + $0xb8] sm:$0xff]
    %v57 = vld [vmem:[#allocation2 + $0xc0] sm:$0xff]
    %v58 = vld [vmem:[#allocation2 + $0xc8] sm:$0xff]
    %v59 = vld [vmem:[#allocation2 + $0xd0] sm:$0xff]
    %v60 = vld [vmem:[#allocation2 + $0xd8] sm:$0xff]
    %v61 = vld [vmem:[#allocation2 + $0xe0] sm:$0xff]
    %v62 = vld [vmem:[#allocation2 + $0xe8] sm:$0xff]
    %v63 = vld [vmem:[#allocation2 + $0xf0] sm:$0xff]
    %v64 = vld [vmem:[#allocation2 + $0xf8] sm:$0xff]
    %v65 = vld [vmem:[#allocation2 + $0x100] sm:$0xff]
    %v66 = vld [vmem:[#allocation2 + $0x108] sm:$0xff]
    %v67 = vld [vmem:[%s3] sm:$0x1]
    %v68 = vld [vmem:[%s3 + $0x1] sm:$0x1]
    %v69 = vld [vmem:[%s3 + $0x2] sm:$0x1]
    %v70 = vld [vmem:[%s3 + $0x3] sm:$0x1]
    %v71 = vld [vmem:[%s3 + $0x4] sm:$0x1]
    %v72 = vlaneseq
    %v73 = vshrl.u32 %v72, 7
    %v74 = vsub.s32 0, %v73
    %v75 = vrot.slane %v67, %v74
    %vm76 = vcmask 130048
    %v78 = vsel %vm76, %v32, 0
    %80 = vmatprep.subr.mxu0 0.0
    %81 = vmatpush1.msra.mxu0 0.0
    %82 = vmatprep.subr.mxu0 0.0
    %83 = vmatpush1.msra.mxu0 0.0
    %84 = vmatprep.subr.mxu0 0.0
    %85 = vmatpush1.msra.mxu0 0.0
    %86 = vmatprep.subr.mxu0 0.0
    %87 = vmatpush1.msra.mxu0 0.0
    %88 = vmatprep.subr.mxu0 0.0
    %89 = vmatpush1.msra.mxu0 0.0
    %90 = vmatprep.subr.mxu0 0.0
    %91 = vmatpush1.msra.mxu0 0.0
    %92 = vmatprep.subr.mxu0 0.0
    %93 = vmatpush1.msra.mxu0 0.0
    %94 = vmatprep.subr.mxu0 0.0
    %95 = vmatpush1.msra.mxu0 0.0
    %96 = vmatprep.subr.mxu0 0.0
    %97 = vmatpush1.msra.mxu0 0.0
    %98 = vmatprep.subr.mxu0 0.0
    %99 = vmatpush1.msra.mxu0 0.0
    %100 = vmatprep.subr.mxu0 0.0
    %101 = vmatpush1.msra.mxu0 0.0
    %102 = vmatprep.subr.mxu0 0.0
    %103 = vmatpush1.msra.mxu0 0.0
    %104 = vmatprep.subr.mxu0 0.0
    %105 = vmatpush1.msra.mxu0 0.0
    %106 = vmatprep.subr.mxu0 0.0
    %107 = vmatpush1.msra.mxu0 0.0
    %108 = vmatprep.subr.mxu0 0.0
    %109 = vmatpush1.msra.mxu0 %v34
    %110 = vmatprep.subr.mxu0 0.0
    %111 = vmatpush1.msra.mxu0 %v33
    %112 = vmatprep.subr.mxu0 0.0
    %113 = vmatpush2.msra.mxu0 0.0
    %114 = vmatprep.subr.mxu0 0.0
    %115 = vmatpush2.msra.mxu0 0.0
    %116 = vmatprep.subr.mxu0 0.0
    %117 = vmatpush2.msra.mxu0 0.0
    %118 = vmatprep.subr.mxu0 0.0
    %119 = vmatpush2.msra.mxu0 0.0
    %120 = vmatprep.subr.mxu0 0.0
    %121 = vmatpush2.msra.mxu0 0.0
    %122 = vmatprep.subr.mxu0 0.0
    %123 = vmatpush2.msra.mxu0 0.0
    %124 = vmatprep.subr.mxu0 0.0
    %125 = vmatpush2.msra.mxu0 0.0
    %126 = vmatprep.subr.mxu0 0.0
    %127 = vmatpush2.msra.mxu0 0.0
    %128 = vmatprep.subr.mxu0 0.0
    %129 = vmatpush2.msra.mxu0 0.0
    %130 = vmatprep.subr.mxu0 0.0
    %131 = vmatpush2.msra.mxu0 0.0
    %132 = vmatprep.subr.mxu0 0.0
    %133 = vmatpush2.msra.mxu0 0.0
    %134 = vmatprep.subr.mxu0 0.0
    %135 = vmatpush2.msra.mxu0 0.0
    %136 = vmatprep.subr.mxu0 0.0
    %137 = vmatpush2.msra.mxu0 0.0
    %138 = vmatprep.subr.mxu0 0.0
    %139 = vmatpush2.msra.mxu0 0.0
    %140 = vmatprep.subr.mxu0 0.0
    %141 = vmatpush2.msra.mxu0 0.0
    %142 = vmatprep.subr.mxu0 0.0
    %143 = vmatpush2.msra.mxu0 0.0
    %144 = vmatprep.mubr.f32.mxu0 0.0
    %145 = vmatmul.mubr.f32.gmra.mxu0 %v78
    %v146 = vpop.f32.mrf.mxu0
    %v147 = vadd.f32 %v75, %v146
    %v148 = vpop.f32.mrf.mxu0
    %149 = vdwg.mxu0
    %v150 = vtanh.pop %v147
    %v151 = vlaneseq
    %v152 = vshrl.u32 %v151, 7
    %v153 = vsub.s32 0, %v152
    %v154 = vrot.slane %v68, %v153
    %155 = vmatprep.subr.mxu0 0.0
    %156 = vmatpush1.msra.mxu0 %v50
    %157 = vmatprep.subr.mxu0 0.0
    %158 = vmatpush1.msra.mxu0 %v49
    %159 = vmatprep.subr.mxu0 0.0
    %160 = vmatpush1.msra.mxu0 %v48
    %161 = vmatprep.subr.mxu0 0.0
    %162 = vmatpush1.msra.mxu0 %v47
    %163 = vmatprep.subr.mxu0 0.0
    %164 = vmatpush1.msra.mxu0 %v46
    %165 = vmatprep.subr.mxu0 0.0
    %166 = vmatpush1.msra.mxu0 %v45
    %167 = vmatprep.subr.mxu0 0.0
    %168 = vmatpush1.msra.mxu0 %v44
    %169 = vmatprep.subr.mxu0 0.0
    %170 = vmatpush1.msra.mxu0 %v43
    %171 = vmatprep.subr.mxu0 0.0
    %172 = vmatpush1.msra.mxu0 %v42
    %173 = vmatprep.subr.mxu0 0.0
    %174 = vmatpush1.msra.mxu0 %v41
    %175 = vmatprep.subr.mxu0 0.0
    %176 = vmatpush1.msra.mxu0 %v40
    %177 = vmatprep.subr.mxu0 0.0
    %178 = vmatpush1.msra.mxu0 %v39
    %179 = vmatprep.subr.mxu0 0.0
    %180 = vmatpush1.msra.mxu0 %v38
    %181 = vmatprep.subr.mxu0 0.0
    %182 = vmatpush1.msra.mxu0 %v37
    %183 = vmatprep.subr.mxu0 0.0
    %184 = vmatpush1.msra.mxu0 %v36
    %185 = vmatprep.subr.mxu0 0.0
    %186 = vmatpush1.msra.mxu0 %v35
    %187 = vmatprep.subr.mxu0 0.0
    %188 = vmatpush2.msra.mxu0 0.0
    %189 = vmatprep.subr.mxu0 0.0
    %190 = vmatpush2.msra.mxu0 0.0
    %191 = vmatprep.subr.mxu0 0.0
    %192 = vmatpush2.msra.mxu0 0.0
    %193 = vmatprep.subr.mxu0 0.0
    %194 = vmatpush2.msra.mxu0 0.0
    %195 = vmatprep.subr.mxu0 0.0
    %196 = vmatpush2.msra.mxu0 0.0
    %197 = vmatprep.subr.mxu0 0.0
    %198 = vmatpush2.msra.mxu0 0.0
    %199 = vmatprep.subr.mxu0 0.0
    %200 = vmatpush2.msra.mxu0 0.0
    %201 = vmatprep.subr.mxu0 0.0
    %202 = vmatpush2.msra.mxu0 0.0
    %203 = vmatprep.subr.mxu0 0.0
    %204 = vmatpush2.msra.mxu0 0.0
    %205 = vmatprep.subr.mxu0 0.0
    %206 = vmatpush2.msra.mxu0 0.0
    %207 = vmatprep.subr.mxu0 0.0
    %208 = vmatpush2.msra.mxu0 0.0
    %209 = vmatprep.subr.mxu0 0.0
    %210 = vmatpush2.msra.mxu0 0.0
    %211 = vmatprep.subr.mxu0 0.0
    %212 = vmatpush2.msra.mxu0 0.0
    %213 = vmatprep.subr.mxu0 0.0
    %214 = vmatpush2.msra.mxu0 0.0
    %215 = vmatprep.subr.mxu0 0.0
    %216 = vmatpush2.msra.mxu0 0.0
    %217 = vmatprep.subr.mxu0 0.0
    %218 = vmatpush2.msra.mxu0 0.0
    %219 = vmatprep.mubr.f32.mxu0 0.0
    %220 = vmatmul.mubr.f32.gmra.mxu0 %v150
    %v221 = vpop.f32.mrf.mxu0
    %v222 = vadd.f32 %v154, %v221
    %v223 = vpop.f32.mrf.mxu0
    %224 = vdwg.mxu0
    %v225 = vtanh.pop %v222
    %v226 = vlaneseq
    %v227 = vshrl.u32 %v226, 7
    %v228 = vsub.s32 0, %v227
    %v229 = vrot.slane %v69, %v228
    %230 = vmatprep.subr.mxu0 0.0
    %231 = vmatpush1.msra.mxu0 %v66
    %232 = vmatprep.subr.mxu0 0.0
    %233 = vmatpush1.msra.mxu0 %v65
    %234 = vmatprep.subr.mxu0 0.0
    %235 = vmatpush1.msra.mxu0 %v64
    %236 = vmatprep.subr.mxu0 0.0
    %237 = vmatpush1.msra.mxu0 %v63
    %238 = vmatprep.subr.mxu0 0.0
    %239 = vmatpush1.msra.mxu0 %v62
    %240 = vmatprep.subr.mxu0 0.0
    %241 = vmatpush1.msra.mxu0 %v61
    %242 = vmatprep.subr.mxu0 0.0
    %243 = vmatpush1.msra.mxu0 %v60
    %244 = vmatprep.subr.mxu0 0.0
    %245 = vmatpush1.msra.mxu0 %v59
    %246 = vmatprep.subr.mxu0 0.0
    %247 = vmatpush1.msra.mxu0 %v58
    %248 = vmatprep.subr.mxu0 0.0
    %249 = vmatpush1.msra.mxu0 %v57
    %250 = vmatprep.subr.mxu0 0.0
    %251 = vmatpush1.msra.mxu0 %v56
    %252 = vmatprep.subr.mxu0 0.0
    %253 = vmatpush1.msra.mxu0 %v55
    %254 = vmatprep.subr.mxu0 0.0
    %255 = vmatpush1.msra.mxu0 %v54
    %256 = vmatprep.subr.mxu0 0.0
    %257 = vmatpush1.msra.mxu0 %v53
    %258 = vmatprep.subr.mxu0 0.0
    %259 = vmatpush1.msra.mxu0 %v52
    %260 = vmatprep.subr.mxu0 0.0
    %261 = vmatpush1.msra.mxu0 %v51
    %262 = vmatprep.subr.mxu0 0.0
    %263 = vmatpush2.msra.mxu0 0.0
    %264 = vmatprep.subr.mxu0 0.0
    %265 = vmatpush2.msra.mxu0 0.0
    %266 = vmatprep.subr.mxu0 0.0
    %267 = vmatpush2.msra.mxu0 0.0
    %268 = vmatprep.subr.mxu0 0.0
    %269 = vmatpush2.msra.mxu0 0.0
    %270 = vmatprep.subr.mxu0 0.0
    %271 = vmatpush2.msra.mxu0 0.0
    %272 = vmatprep.subr.mxu0 0.0
    %273 = vmatpush2.msra.mxu0 0.0
    %274 = vmatprep.subr.mxu0 0.0
    %275 = vmatpush2.msra.mxu0 0.0
    %276 = vmatprep.subr.mxu0 0.0
    %277 = vmatpush2.msra.mxu0 0.0
    %278 = vmatprep.subr.mxu0 0.0
    %279 = vmatpush2.msra.mxu0 0.0
    %280 = vmatprep.subr.mxu0 0.0
    %281 = vmatpush2.msra.mxu0 0.0
    %282 = vmatprep.subr.mxu0 0.0
    %283 = vmatpush2.msra.mxu0 0.0
    %284 = vmatprep.subr.mxu0 0.0
    %285 = vmatpush2.msra.mxu0 0.0
    %286 = vmatprep.subr.mxu0 0.0
    %287 = vmatpush2.msra.mxu0 0.0
    %288 = vmatprep.subr.mxu0 0.0
    %289 = vmatpush2.msra.mxu0 0.0
    %290 = vmatprep.subr.mxu0 0.0
    %291 = vmatpush2.msra.mxu0 0.0
    %292 = vmatprep.subr.mxu0 0.0
    %293 = vmatpush2.msra.mxu0 0.0
    %294 = vmatprep.mubr.f32.mxu0 0.0
    %295 = vmatmul.mubr.f32.gmra.mxu0 %v225
    %v296 = vpop.f32.mrf.mxu0
    %v297 = vadd.f32 %v229, %v296
    %v298 = vpop.f32.mrf.mxu0
    %299 = vdwg.mxu0
    %v300 = vld [vmem:[%s1] sm:$0xff]
    %v301 = vsub.f32 %v300, %v297
    %v302 = vmul.f32 %v301, %v301
    %v303 = vsub.f32 0.0, %v302
    %v304 = vlaneseq
    %v305 = vshrl.u32 %v304, 7
    %v306 = vsub.s32 0, %v305
    %v307 = vrot.slane %v70, %v306
    %v308 = vmul.f32 %v303, %v307
    %v309 = vlaneseq
    %v310 = vshrl.u32 %v309, 7
    %v311 = vsub.s32 0, %v310
    %v312 = vrot.slane %v71, %v311
    %v313 = vadd.f32 %v308, %v312
    %vm314 = vcmask 31744
    %v315 = vsel %vm314, %v313, 0.0
    %316 = vadd.xlane.f32.xlu0 %v315
    %v317 = vpop.xlane.xlu0 %316
    %v318 = vlaneseq
    %v319 = vand.u32 %v318, 127
    %vm320 = vcmp.eq.s32.totalorder %v319, 5
    %v321 = vsel %vm320, %v317, %v297
    %322 = vst [vmem:[#allocation5] sm:$0xff] %v321
    // Predicated region
    $region22: #{tpu_custom_call.1} parent=1 // pred_check
      _
    $region23: #{tpu_custom_call.1} parent=1 // pred_check_branch
      %324 = sbr.rel (0) target = $region25
    $region24: #{tpu_custom_call.1} parent=1 // pred_region
      %s326 = ssub.s32 128, 128
      %327 = vsyncadd [#allocation4], %s326
      %s329 = sshll.u32 [#allocation5], 4
      %s330 = int_to_ptr.vmem [resolvable:$true] %s329
      %332 = dma.vmem_to_hbm [thread:$0]  %s330, 128, %s4, [#allocation4]
    $region25: #{tpu_custom_call.1} parent=1 // pred_fallthru
      _
    // Predicated region
    $region26: #{tpu_custom_call.1} parent=1 // pred_check
      _
    $region27: #{tpu_custom_call.1} parent=1 // pred_check_branch
      %334 = sbr.rel (0) target = $region29
    $region28: #{tpu_custom_call.1} parent=1 // pred_region
      %335 = dma.done [#allocation4], 128
    $region29: #{tpu_custom_call.1} parent=1 // pred_fallthru
      _
    %336 = vsyncpa [#allocation3], 1
    %337 = vsyncpa [#allocation4], 1

</llo_original>
